<compile_context>
chip_gen: v7x
topology: tpu7x:2x2x1
jax: 0.10.0
libtpu: 0.0.40
codegen_flags: <defaults>
</compile_context>

<pallas_src>
import functools

import jax
import jax.numpy as jnp
from jax import lax
from jax.experimental import pallas as pl
from jax.experimental.pallas import tpu as pltpu

_UNROLL = 8  # points gathered per unrolled inner-loop body


def _pose_loss_kernel(rows_ref, w_ref, tsdf_hbm_ref, partial_ref,
                      tsdf_vmem, g00_ref, g01_ref, g10_ref, g11_ref, copy_sem,
                      *, M, TM, H):
    t = pl.program_id(0)

    # ---- Stage 0: bring the TSDF volume into VMEM exactly once -------------
    @pl.when(t == 0)
    def _():
        cp = pltpu.make_async_copy(tsdf_hbm_ref, tsdf_vmem, copy_sem)
        cp.start()
        cp.wait()

    # ---- Stage A: gather the 4 (b, x, y) corner rows for this point tile ---
    base_g = t * TM  # first global point index of this tile

    @pl.loop(0, TM // _UNROLL)
    def _(blk):
        mb = blk * _UNROLL
        gb = (base_g + mb) * 4  # rows are point-major: [r00, r01, r10, r11]
        # Hoist the SMEM scalar reads for the 8 points ahead of the copies.
        rs = [(rows_ref[gb + 4 * u + 0],
               rows_ref[gb + 4 * u + 1],
               rows_ref[gb + 4 * u + 2],
               rows_ref[gb + 4 * u + 3]) for u in range(_UNROLL)]
        for u in range(_UNROLL):
            r00, r01, r10, r11 = rs[u]
            m = mb + u
            g00_ref[pl.ds(m, 1), :] = tsdf_vmem[pl.ds(r00, 1), :]
            g01_ref[pl.ds(m, 1), :] = tsdf_vmem[pl.ds(r01, 1), :]
            g10_ref[pl.ds(m, 1), :] = tsdf_vmem[pl.ds(r10, 1), :]
            g11_ref[pl.ds(m, 1), :] = tsdf_vmem[pl.ds(r11, 1), :]

    # ---- Stage B: trilinear interpolation + Huber partial sum --------------
    w = w_ref[...]                              # [TM, 8] precomputed weights
    wx0 = w[:, 0:1]; wx1 = w[:, 1:2]
    wy0 = w[:, 2:3]; wy1 = w[:, 3:4]
    wz0 = w[:, 4:5]; wz1 = w[:, 5:6]
    z0i = w[:, 6:7].astype(jnp.int32)
    z1i = w[:, 7:8].astype(jnp.int32)

    # tiny z one-hot over the H-wide lane row (weights add if clamped corners
    # collapse, matching the reference gather-twice behaviour)
    h_iota = lax.broadcasted_iota(jnp.int32, (TM, H), 1)
    zvec = (jnp.where(h_iota == z0i, wz0, 0.0)
            + jnp.where(h_iota == z1i, wz1, 0.0))             # [TM, H]

    # fuse the four weighted rows, then a single cross-lane reduction
    g = ((wx0 * wy0) * g00_ref[...] + (wx0 * wy1) * g01_ref[...]
         + (wx1 * wy0) * g10_ref[...] + (wx1 * wy1) * g11_ref[...])
    sdf = jnp.sum(g * zvec, axis=1, keepdims=True)            # [TM, 1]

    # Huber loss vs zero, delta = 1.0; mask out padded points; partial sum
    a = jnp.abs(sdf)
    per = jnp.where(a <= 1.0, 0.5 * sdf * sdf, a - 0.5)       # [TM, 1]
    m_iota = lax.broadcasted_iota(jnp.int32, (TM, 1), 0) + base_g
    valid = (m_iota < M).astype(jnp.float32)
    partial_ref[pl.ds(t, 1), :] = jnp.sum(per * valid, axis=0, keepdims=True)


def _padded_vmem_bytes(rows, cols):
    """f32 VMEM footprint of a (rows, cols) array after (8,128) tiling."""
    return ((rows + 7) // 8 * 8) * ((cols + 127) // 128 * 128) * 4


def pose_estimate_loss_batch(tsdf_grid, pts_centroid, grid_unit):
    """tsdf_grid [B,L,W,H] f32, pts_centroid [B,N,3] f32, grid_unit [3] f32 -> scalar."""
    B, L, W, H = tsdf_grid.shape
    _, N, _ = pts_centroid.shape
    M = B * N
    R = B * L * W
    assert R < 2 ** 31, "row index would overflow int32"  # TODO(synk): widen

    # point tile size (multiple of 8); pad M up to a whole number of tiles
    TM = 128 if M >= 128 else max(_UNROLL, ((M + 7) // 8) * 8)
    num_tiles = -(-M // TM)
    Mp = num_tiles * TM

    tsdf2d = tsdf_grid.reshape(R, H).astype(jnp.float32)   # row = (b,x,y), H on lanes
    p = pts_centroid.reshape(M, 3).astype(jnp.float32)
    gu = grid_unit.astype(jnp.float32)
    inv_gu = 1.0 / gu

    # --- integer block (mirrors torch.no_grad()) + weights, from ONE floor ---
    mins_f = jnp.floor(p * inv_gu)                                   # unclamped
    local = (p - mins_f * gu) * (2.0 * inv_gu) - 1.0                 # in [-1, 1]
    wmax = (local + 1.0) * 0.5
    wmin = 1.0 - wmax

    dims = jnp.array([L, W, H], jnp.float32)
    i0 = jnp.clip(mins_f, 0.0, dims - 1.0)                           # clamped mins
    i1 = jnp.clip(mins_f + 1.0, 0.0, dims - 1.0)                     # clamped maxes
    x0 = i0[:, 0].astype(jnp.int32); x1 = i1[:, 0].astype(jnp.int32)
    y0 = i0[:, 1].astype(jnp.int32); y1 = i1[:, 1].astype(jnp.int32)

    b = jnp.repeat(jnp.arange(B, dtype=jnp.int32), N)
    base0 = (b * L + x0) * W
    base1 = (b * L + x1) * W
    # point-major corner-row table, flattened to 1-D to avoid SMEM 2-D padding
    rows = jnp.stack([base0 + y0, base0 + y1, base1 + y0, base1 + y1], axis=1)
    rows = jnp.pad(rows, ((0, Mp - M), (0, 0))).reshape(-1)          # [4*Mp] int32

    # per-point payload: [wx0, wx1, wy0, wy1, wz0, wz1, z0, z1]
    payload = jnp.concatenate([
        wmin[:, 0:1], wmax[:, 0:1],
        wmin[:, 1:2], wmax[:, 1:2],
        wmin[:, 2:3], wmax[:, 2:3],
        i0[:, 2:3], i1[:, 2:3],
    ], axis=1)
    payload = jnp.pad(payload, ((0, Mp - M), (0, 0)))                # [Mp, 8]

    # explicit scoped-VMEM budget: single-buffered tsdf + gather scratch + margin
    vmem_needed = (_padded_vmem_bytes(R, H)
                   + 4 * _padded_vmem_bytes(TM, H)
                   + 2 * _padded_vmem_bytes(TM, 8)
                   + _padded_vmem_bytes(num_tiles, 1))
    vmem_limit = int(min(128 << 20, max(vmem_needed + (4 << 20), 32 << 20)))

    kernel = functools.partial(_pose_loss_kernel, M=M, TM=TM, H=H)

    partials = pl.pallas_call(
        kernel,
        out_shape=jax.ShapeDtypeStruct((num_tiles, 1), jnp.float32),
        grid_spec=pltpu.PrefetchScalarGridSpec(
            num_scalar_prefetch=1,                       # rows table -> SMEM
            grid=(num_tiles,),
            in_specs=[
                pl.BlockSpec((TM, 8), lambda t, rows_smem: (t, 0)),  # weights
                pl.BlockSpec(memory_space=pl.ANY),                   # tsdf (HBM)
            ],
            out_specs=pl.BlockSpec((num_tiles, 1), lambda t, rows_smem: (0, 0)),
            scratch_shapes=[
                pltpu.VMEM((R, H), jnp.float32),      # single-buffered TSDF copy
                pltpu.VMEM((TM, H), jnp.float32),     # gathered (x0, y0) rows
                pltpu.VMEM((TM, H), jnp.float32),     # gathered (x0, y1) rows
                pltpu.VMEM((TM, H), jnp.float32),     # gathered (x1, y0) rows
                pltpu.VMEM((TM, H), jnp.float32),     # gathered (x1, y1) rows
                pltpu.SemaphoreType.DMA,              # tsdf HBM->VMEM copy sem
            ],
        ),
        compiler_params=pltpu.CompilerParams(
            dimension_semantics=("arbitrary",),       # copy-once gate needs sequential
            vmem_limit_bytes=vmem_limit),
    )(rows, payload, tsdf2d)

    return jnp.sum(partials) * (1.0 / M)


def _reference_loss(tsdf_grid, pts_centroid, grid_unit):
    """Pure-JAX reference mirroring the PyTorch forward (same arithmetic form)."""
    B, L, W, H = tsdf_grid.shape
    _, N, _ = pts_centroid.shape
    p = pts_centroid.reshape(-1, 3).astype(jnp.float32)
    gu = grid_unit.astype(jnp.float32)
    inv_gu = 1.0 / gu
    mins_f = jnp.floor(p * inv_gu)                      # unclamped floor
    local = (p - mins_f * gu) * (2.0 * inv_gu) - 1.0    # local coords in [-1, 1]
    dims = jnp.array([L, W, H], jnp.float32)
    i0 = jnp.clip(mins_f, 0.0, dims - 1.0).astype(jnp.int32)
    i1 = jnp.clip(mins_f + 1.0, 0.0, dims - 1.0).astype(jnp.int32)
    b = jnp.repeat(jnp.arange(B), N)

    wp = (local + 1.0) * 0.5
    wm = 1.0 - wp
    corners = [
        (i1[:, 0], i1[:, 1], i1[:, 2], wp[:, 0] * wp[:, 1] * wp[:, 2]),
        (i1[:, 0], i1[:, 1], i0[:, 2], wp[:, 0] * wp[:, 1] * wm[:, 2]),
        (i1[:, 0], i0[:, 1], i1[:, 2], wp[:, 0] * wm[:, 1] * wp[:, 2]),
        (i1[:, 0], i0[:, 1], i0[:, 2], wp[:, 0] * wm[:, 1] * wm[:, 2]),
        (i0[:, 0], i1[:, 1], i1[:, 2], wm[:, 0] * wp[:, 1] * wp[:, 2]),
        (i0[:, 0], i1[:, 1], i0[:, 2], wm[:, 0] * wp[:, 1] * wm[:, 2]),
        (i0[:, 0], i0[:, 1], i1[:, 2], wm[:, 0] * wm[:, 1] * wp[:, 2]),
        (i0[:, 0], i0[:, 1], i0[:, 2], wm[:, 0] * wm[:, 1] * wm[:, 2]),
    ]
    sdf = sum(tsdf_grid[b, xi, yi, zi] * w for xi, yi, zi, w in corners)
    a = jnp.abs(sdf)
    per = jnp.where(a <= 1.0, 0.5 * sdf * sdf, a - 0.5)
    return jnp.mean(per)


if __name__ == "__main__":
    key = jax.random.PRNGKey(0)
    k1, k2 = jax.random.split(key)

    B, L, W, H, N = 2, 16, 16, 16, 8
    grid_unit = jnp.array([0.25, 0.25, 0.25], jnp.float32)

    tsdf_grid = jax.random.normal(k1, (B, L, W, H), jnp.float32)
    # points inside (0, dim * unit)
    pts_centroid = jax.random.uniform(
        k2, (B, N, 3), jnp.float32, minval=0.05, maxval=0.95
    ) * (jnp.array([L, W, H], jnp.float32) * grid_unit)

    loss = pose_estimate_loss_batch(tsdf_grid, pts_centroid, grid_unit)
    loss = jax.block_until_ready(loss)

    ref = _reference_loss(tsdf_grid, pts_centroid, grid_unit)
    assert jnp.allclose(loss, ref, rtol=1e-5, atol=1e-5), (loss, ref)

    print("KERNEL_OK")
</pallas_src>

<mosaic_0001>
module attributes {stable_mosaic.version = 11 : i64} {
  func.func @_pose_loss_kernel(%arg0: i32, %arg1: memref<64xi32, #tpu.memory_space<smem>>, %arg2: memref<16x8xf32, #tpu.memory_space<vmem>>, %arg3: memref<512x16xf32, #tpu.memory_space<any>>, %arg4: memref<1x1xf32, #tpu.memory_space<vmem>>, %arg5: memref<512x16xf32, #tpu.memory_space<vmem>>, %arg6: memref<16x16xf32, #tpu.memory_space<vmem>>, %arg7: memref<16x16xf32, #tpu.memory_space<vmem>>, %arg8: memref<16x16xf32, #tpu.memory_space<vmem>>, %arg9: memref<16x16xf32, #tpu.memory_space<vmem>>, %arg10: memref<!tpu.dma_semaphore, #tpu.memory_space<semaphore_mem>>) attributes {dimension_semantics = [#tpu.dimension_semantics<arbitrary>], iteration_bounds = array<i64: 1>, scalar_prefetch = 1 : i64, scratch_operands = 6 : i64, tpu.core_type = #tpu.core_type<tc>, window_params = [{transform_indices = @transform_0, window_bounds = array<i64: 16, 8>}, {}, {pipeline_mode = #tpu.pipeline_mode<synchronous>, transform_indices = @transform_2, window_bounds = array<i64: 1, 1>}]} {
    %c0_i32 = arith.constant 0 : i32
    %0 = arith.cmpi eq, %arg0, %c0_i32 : i32
    %1 = arith.extui %0 : i1 to i32
    %c0_i32_0 = arith.constant 0 : i32
    %2 = arith.cmpi ne, %1, %c0_i32_0 : i32
    scf.if %2 {
      tpu.enqueue_dma source(%arg3 : memref<512x16xf32, #tpu.memory_space<any>>) target(%arg5 : memref<512x16xf32, #tpu.memory_space<vmem>>) target_semaphore(%arg10 : memref<!tpu.dma_semaphore, #tpu.memory_space<semaphore_mem>>)
      tpu.wait_dma2 semaphore(%arg10 : memref<!tpu.dma_semaphore, #tpu.memory_space<semaphore_mem>>) src(%arg3 : memref<512x16xf32, #tpu.memory_space<any>>) dst(%arg5 : memref<512x16xf32, #tpu.memory_space<vmem>>)
    } else {
    }
    %c16_i32 = arith.constant 16 : i32
    %3 = arith.muli %arg0, %c16_i32 : i32
    %c0_i32_1 = arith.constant 0 : i32
    %c2_i32 = arith.constant 2 : i32
    %4 = arith.addi %c0_i32_1, %c2_i32 : i32
    %c1_i32 = arith.constant 1 : i32
    scf.for %arg11 = %c0_i32_1 to %4 step %c1_i32  : i32 {
      %c1_i32_20 = arith.constant 1 : i32
      %73 = arith.muli %arg11, %c1_i32_20 : i32
      %c0_i32_21 = arith.constant 0 : i32
      %74 = arith.addi %c0_i32_21, %73 : i32
      %c8_i32 = arith.constant 8 : i32
      %75 = arith.muli %74, %c8_i32 : i32
      %76 = arith.addi %3, %75 : i32
      %c4_i32 = arith.constant 4 : i32
      %77 = arith.muli %76, %c4_i32 : i32
      %c0_i32_22 = arith.constant 0 : i32
      %78 = arith.addi %77, %c0_i32_22 : i32
      %c0_i32_23 = arith.constant 0 : i32
      %79 = arith.addi %78, %c0_i32_23 : i32
      %80 = arith.index_cast %79 : i32 to index
      %81 = memref.load %arg1[%80] : memref<64xi32, #tpu.memory_space<smem>>
      %c0_i32_24 = arith.constant 0 : i32
      %82 = arith.addi %77, %c0_i32_24 : i32
      %c1_i32_25 = arith.constant 1 : i32
      %83 = arith.addi %82, %c1_i32_25 : i32
      %84 = arith.index_cast %83 : i32 to index
      %85 = memref.load %arg1[%84] : memref<64xi32, #tpu.memory_space<smem>>
      %c0_i32_26 = arith.constant 0 : i32
      %86 = arith.addi %77, %c0_i32_26 : i32
      %c2_i32_27 = arith.constant 2 : i32
      %87 = arith.addi %86, %c2_i32_27 : i32
      %88 = arith.index_cast %87 : i32 to index
      %89 = memref.load %arg1[%88] : memref<64xi32, #tpu.memory_space<smem>>
      %c0_i32_28 = arith.constant 0 : i32
      %90 = arith.addi %77, %c0_i32_28 : i32
      %c3_i32 = arith.constant 3 : i32
      %91 = arith.addi %90, %c3_i32 : i32
      %92 = arith.index_cast %91 : i32 to index
      %93 = memref.load %arg1[%92] : memref<64xi32, #tpu.memory_space<smem>>
      %c4_i32_29 = arith.constant 4 : i32
      %94 = arith.addi %77, %c4_i32_29 : i32
      %c0_i32_30 = arith.constant 0 : i32
      %95 = arith.addi %94, %c0_i32_30 : i32
      %96 = arith.index_cast %95 : i32 to index
      %97 = memref.load %arg1[%96] : memref<64xi32, #tpu.memory_space<smem>>
      %c4_i32_31 = arith.constant 4 : i32
      %98 = arith.addi %77, %c4_i32_31 : i32
      %c1_i32_32 = arith.constant 1 : i32
      %99 = arith.addi %98, %c1_i32_32 : i32
      %100 = arith.index_cast %99 : i32 to index
      %101 = memref.load %arg1[%100] : memref<64xi32, #tpu.memory_space<smem>>
      %c4_i32_33 = arith.constant 4 : i32
      %102 = arith.addi %77, %c4_i32_33 : i32
      %c2_i32_34 = arith.constant 2 : i32
      %103 = arith.addi %102, %c2_i32_34 : i32
      %104 = arith.index_cast %103 : i32 to index
      %105 = memref.load %arg1[%104] : memref<64xi32, #tpu.memory_space<smem>>
      %c4_i32_35 = arith.constant 4 : i32
      %106 = arith.addi %77, %c4_i32_35 : i32
      %c3_i32_36 = arith.constant 3 : i32
      %107 = arith.addi %106, %c3_i32_36 : i32
      %108 = arith.index_cast %107 : i32 to index
      %109 = memref.load %arg1[%108] : memref<64xi32, #tpu.memory_space<smem>>
      %c8_i32_37 = arith.constant 8 : i32
      %110 = arith.addi %77, %c8_i32_37 : i32
      %c0_i32_38 = arith.constant 0 : i32
      %111 = arith.addi %110, %c0_i32_38 : i32
      %112 = arith.index_cast %111 : i32 to index
      %113 = memref.load %arg1[%112] : memref<64xi32, #tpu.memory_space<smem>>
      %c8_i32_39 = arith.constant 8 : i32
      %114 = arith.addi %77, %c8_i32_39 : i32
      %c1_i32_40 = arith.constant 1 : i32
      %115 = arith.addi %114, %c1_i32_40 : i32
      %116 = arith.index_cast %115 : i32 to index
      %117 = memref.load %arg1[%116] : memref<64xi32, #tpu.memory_space<smem>>
      %c8_i32_41 = arith.constant 8 : i32
      %118 = arith.addi %77, %c8_i32_41 : i32
      %c2_i32_42 = arith.constant 2 : i32
      %119 = arith.addi %118, %c2_i32_42 : i32
      %120 = arith.index_cast %119 : i32 to index
      %121 = memref.load %arg1[%120] : memref<64xi32, #tpu.memory_space<smem>>
      %c8_i32_43 = arith.constant 8 : i32
      %122 = arith.addi %77, %c8_i32_43 : i32
      %c3_i32_44 = arith.constant 3 : i32
      %123 = arith.addi %122, %c3_i32_44 : i32
      %124 = arith.index_cast %123 : i32 to index
      %125 = memref.load %arg1[%124] : memref<64xi32, #tpu.memory_space<smem>>
      %c12_i32 = arith.constant 12 : i32
      %126 = arith.addi %77, %c12_i32 : i32
      %c0_i32_45 = arith.constant 0 : i32
      %127 = arith.addi %126, %c0_i32_45 : i32
      %128 = arith.index_cast %127 : i32 to index
      %129 = memref.load %arg1[%128] : memref<64xi32, #tpu.memory_space<smem>>
      %c12_i32_46 = arith.constant 12 : i32
      %130 = arith.addi %77, %c12_i32_46 : i32
      %c1_i32_47 = arith.constant 1 : i32
      %131 = arith.addi %130, %c1_i32_47 : i32
      %132 = arith.index_cast %131 : i32 to index
      %133 = memref.load %arg1[%132] : memref<64xi32, #tpu.memory_space<smem>>
      %c12_i32_48 = arith.constant 12 : i32
      %134 = arith.addi %77, %c12_i32_48 : i32
      %c2_i32_49 = arith.constant 2 : i32
      %135 = arith.addi %134, %c2_i32_49 : i32
      %136 = arith.index_cast %135 : i32 to index
      %137 = memref.load %arg1[%136] : memref<64xi32, #tpu.memory_space<smem>>
      %c12_i32_50 = arith.constant 12 : i32
      %138 = arith.addi %77, %c12_i32_50 : i32
      %c3_i32_51 = arith.constant 3 : i32
      %139 = arith.addi %138, %c3_i32_51 : i32
      %140 = arith.index_cast %139 : i32 to index
      %141 = memref.load %arg1[%140] : memref<64xi32, #tpu.memory_space<smem>>
      %c16_i32_52 = arith.constant 16 : i32
      %142 = arith.addi %77, %c16_i32_52 : i32
      %c0_i32_53 = arith.constant 0 : i32
      %143 = arith.addi %142, %c0_i32_53 : i32
      %144 = arith.index_cast %143 : i32 to index
      %145 = memref.load %arg1[%144] : memref<64xi32, #tpu.memory_space<smem>>
      %c16_i32_54 = arith.constant 16 : i32
      %146 = arith.addi %77, %c16_i32_54 : i32
      %c1_i32_55 = arith.constant 1 : i32
      %147 = arith.addi %146, %c1_i32_55 : i32
      %148 = arith.index_cast %147 : i32 to index
      %149 = memref.load %arg1[%148] : memref<64xi32, #tpu.memory_space<smem>>
      %c16_i32_56 = arith.constant 16 : i32
      %150 = arith.addi %77, %c16_i32_56 : i32
      %c2_i32_57 = arith.constant 2 : i32
      %151 = arith.addi %150, %c2_i32_57 : i32
      %152 = arith.index_cast %151 : i32 to index
      %153 = memref.load %arg1[%152] : memref<64xi32, #tpu.memory_space<smem>>
      %c16_i32_58 = arith.constant 16 : i32
      %154 = arith.addi %77, %c16_i32_58 : i32
      %c3_i32_59 = arith.constant 3 : i32
      %155 = arith.addi %154, %c3_i32_59 : i32
      %156 = arith.index_cast %155 : i32 to index
      %157 = memref.load %arg1[%156] : memref<64xi32, #tpu.memory_space<smem>>
      %c20_i32 = arith.constant 20 : i32
      %158 = arith.addi %77, %c20_i32 : i32
      %c0_i32_60 = arith.constant 0 : i32
      %159 = arith.addi %158, %c0_i32_60 : i32
      %160 = arith.index_cast %159 : i32 to index
      %161 = memref.load %arg1[%160] : memref<64xi32, #tpu.memory_space<smem>>
      %c20_i32_61 = arith.constant 20 : i32
      %162 = arith.addi %77, %c20_i32_61 : i32
      %c1_i32_62 = arith.constant 1 : i32
      %163 = arith.addi %162, %c1_i32_62 : i32
      %164 = arith.index_cast %163 : i32 to index
      %165 = memref.load %arg1[%164] : memref<64xi32, #tpu.memory_space<smem>>
      %c20_i32_63 = arith.constant 20 : i32
      %166 = arith.addi %77, %c20_i32_63 : i32
      %c2_i32_64 = arith.constant 2 : i32
      %167 = arith.addi %166, %c2_i32_64 : i32
      %168 = arith.index_cast %167 : i32 to index
      %169 = memref.load %arg1[%168] : memref<64xi32, #tpu.memory_space<smem>>
      %c20_i32_65 = arith.constant 20 : i32
      %170 = arith.addi %77, %c20_i32_65 : i32
      %c3_i32_66 = arith.constant 3 : i32
      %171 = arith.addi %170, %c3_i32_66 : i32
      %172 = arith.index_cast %171 : i32 to index
      %173 = memref.load %arg1[%172] : memref<64xi32, #tpu.memory_space<smem>>
      %c24_i32 = arith.constant 24 : i32
      %174 = arith.addi %77, %c24_i32 : i32
      %c0_i32_67 = arith.constant 0 : i32
      %175 = arith.addi %174, %c0_i32_67 : i32
      %176 = arith.index_cast %175 : i32 to index
      %177 = memref.load %arg1[%176] : memref<64xi32, #tpu.memory_space<smem>>
      %c24_i32_68 = arith.constant 24 : i32
      %178 = arith.addi %77, %c24_i32_68 : i32
      %c1_i32_69 = arith.constant 1 : i32
      %179 = arith.addi %178, %c1_i32_69 : i32
      %180 = arith.index_cast %179 : i32 to index
      %181 = memref.load %arg1[%180] : memref<64xi32, #tpu.memory_space<smem>>
      %c24_i32_70 = arith.constant 24 : i32
      %182 = arith.addi %77, %c24_i32_70 : i32
      %c2_i32_71 = arith.constant 2 : i32
      %183 = arith.addi %182, %c2_i32_71 : i32
      %184 = arith.index_cast %183 : i32 to index
      %185 = memref.load %arg1[%184] : memref<64xi32, #tpu.memory_space<smem>>
      %c24_i32_72 = arith.constant 24 : i32
      %186 = arith.addi %77, %c24_i32_72 : i32
      %c3_i32_73 = arith.constant 3 : i32
      %187 = arith.addi %186, %c3_i32_73 : i32
      %188 = arith.index_cast %187 : i32 to index
      %189 = memref.load %arg1[%188] : memref<64xi32, #tpu.memory_space<smem>>
      %c28_i32 = arith.constant 28 : i32
      %190 = arith.addi %77, %c28_i32 : i32
      %c0_i32_74 = arith.constant 0 : i32
      %191 = arith.addi %190, %c0_i32_74 : i32
      %192 = arith.index_cast %191 : i32 to index
      %193 = memref.load %arg1[%192] : memref<64xi32, #tpu.memory_space<smem>>
      %c28_i32_75 = arith.constant 28 : i32
      %194 = arith.addi %77, %c28_i32_75 : i32
      %c1_i32_76 = arith.constant 1 : i32
      %195 = arith.addi %194, %c1_i32_76 : i32
      %196 = arith.index_cast %195 : i32 to index
      %197 = memref.load %arg1[%196] : memref<64xi32, #tpu.memory_space<smem>>
      %c28_i32_77 = arith.constant 28 : i32
      %198 = arith.addi %77, %c28_i32_77 : i32
      %c2_i32_78 = arith.constant 2 : i32
      %199 = arith.addi %198, %c2_i32_78 : i32
      %200 = arith.index_cast %199 : i32 to index
      %201 = memref.load %arg1[%200] : memref<64xi32, #tpu.memory_space<smem>>
      %c28_i32_79 = arith.constant 28 : i32
      %202 = arith.addi %77, %c28_i32_79 : i32
      %c3_i32_80 = arith.constant 3 : i32
      %203 = arith.addi %202, %c3_i32_80 : i32
      %204 = arith.index_cast %203 : i32 to index
      %205 = memref.load %arg1[%204] : memref<64xi32, #tpu.memory_space<smem>>
      %c0_i32_81 = arith.constant 0 : i32
      %206 = arith.addi %75, %c0_i32_81 : i32
      %207 = arith.index_cast %81 : i32 to index
      %c0_82 = arith.constant 0 : index
      %208 = vector.load %arg5[%207, %c0_82] : memref<512x16xf32, #tpu.memory_space<vmem>>, vector<1x16xf32>
      %209 = arith.index_cast %206 : i32 to index
      %c0_83 = arith.constant 0 : index
      %210 = vector.load %arg6[%209, %c0_83] : memref<16x16xf32, #tpu.memory_space<vmem>>, vector<1x16xf32>
      tpu.vector_store %arg6[%209, %c0_83], %208 {strides = array<i32>} : memref<16x16xf32, #tpu.memory_space<vmem>>, vector<1x16xf32>,
      %211 = arith.index_cast %85 : i32 to index
      %c0_84 = arith.constant 0 : index
      %212 = vector.load %arg5[%211, %c0_84] : memref<512x16xf32, #tpu.memory_space<vmem>>, vector<1x16xf32>
      %213 = arith.index_cast %206 : i32 to index
      %c0_85 = arith.constant 0 : index
      %214 = vector.load %arg7[%213, %c0_85] : memref<16x16xf32, #tpu.memory_space<vmem>>, vector<1x16xf32>
      tpu.vector_store %arg7[%213, %c0_85], %212 {strides = array<i32>} : memref<16x16xf32, #tpu.memory_space<vmem>>, vector<1x16xf32>,
      %215 = arith.index_cast %89 : i32 to index
      %c0_86 = arith.constant 0 : index
      %216 = vector.load %arg5[%215, %c0_86] : memref<512x16xf32, #tpu.memory_space<vmem>>, vector<1x16xf32>
      %217 = arith.index_cast %206 : i32 to index
      %c0_87 = arith.constant 0 : index
      %218 = vector.load %arg8[%217, %c0_87] : memref<16x16xf32, #tpu.memory_space<vmem>>, vector<1x16xf32>
      tpu.vector_store %arg8[%217, %c0_87], %216 {strides = array<i32>} : memref<16x16xf32, #tpu.memory_space<vmem>>, vector<1x16xf32>,
      %219 = arith.index_cast %93 : i32 to index
      %c0_88 = arith.constant 0 : index
      %220 = vector.load %arg5[%219, %c0_88] : memref<512x16xf32, #tpu.memory_space<vmem>>, vector<1x16xf32>
      %221 = arith.index_cast %206 : i32 to index
      %c0_89 = arith.constant 0 : index
      %222 = vector.load %arg9[%221, %c0_89] : memref<16x16xf32, #tpu.memory_space<vmem>>, vector<1x16xf32>
      tpu.vector_store %arg9[%221, %c0_89], %220 {strides = array<i32>} : memref<16x16xf32, #tpu.memory_space<vmem>>, vector<1x16xf32>,
      %c1_i32_90 = arith.constant 1 : i32
      %223 = arith.addi %75, %c1_i32_90 : i32
      %224 = arith.index_cast %97 : i32 to index
      %c0_91 = arith.constant 0 : index
      %225 = vector.load %arg5[%224, %c0_91] : memref<512x16xf32, #tpu.memory_space<vmem>>, vector<1x16xf32>
      %226 = arith.index_cast %223 : i32 to index
      %c0_92 = arith.constant 0 : index
      %227 = vector.load %arg6[%226, %c0_92] : memref<16x16xf32, #tpu.memory_space<vmem>>, vector<1x16xf32>
      tpu.vector_store %arg6[%226, %c0_92], %225 {strides = array<i32>} : memref<16x16xf32, #tpu.memory_space<vmem>>, vector<1x16xf32>,
      %228 = arith.index_cast %101 : i32 to index
      %c0_93 = arith.constant 0 : index
      %229 = vector.load %arg5[%228, %c0_93] : memref<512x16xf32, #tpu.memory_space<vmem>>, vector<1x16xf32>
      %230 = arith.index_cast %223 : i32 to index
      %c0_94 = arith.constant 0 : index
      %231 = vector.load %arg7[%230, %c0_94] : memref<16x16xf32, #tpu.memory_space<vmem>>, vector<1x16xf32>
      tpu.vector_store %arg7[%230, %c0_94], %229 {strides = array<i32>} : memref<16x16xf32, #tpu.memory_space<vmem>>, vector<1x16xf32>,
      %232 = arith.index_cast %105 : i32 to index
      %c0_95 = arith.constant 0 : index
      %233 = vector.load %arg5[%232, %c0_95] : memref<512x16xf32, #tpu.memory_space<vmem>>, vector<1x16xf32>
      %234 = arith.index_cast %223 : i32 to index
      %c0_96 = arith.constant 0 : index
      %235 = vector.load %arg8[%234, %c0_96] : memref<16x16xf32, #tpu.memory_space<vmem>>, vector<1x16xf32>
      tpu.vector_store %arg8[%234, %c0_96], %233 {strides = array<i32>} : memref<16x16xf32, #tpu.memory_space<vmem>>, vector<1x16xf32>,
      %236 = arith.index_cast %109 : i32 to index
      %c0_97 = arith.constant 0 : index
      %237 = vector.load %arg5[%236, %c0_97] : memref<512x16xf32, #tpu.memory_space<vmem>>, vector<1x16xf32>
      %238 = arith.index_cast %223 : i32 to index
      %c0_98 = arith.constant 0 : index
      %239 = vector.load %arg9[%238, %c0_98] : memref<16x16xf32, #tpu.memory_space<vmem>>, vector<1x16xf32>
      tpu.vector_store %arg9[%238, %c0_98], %237 {strides = array<i32>} : memref<16x16xf32, #tpu.memory_space<vmem>>, vector<1x16xf32>,
      %c2_i32_99 = arith.constant 2 : i32
      %240 = arith.addi %75, %c2_i32_99 : i32
      %241 = arith.index_cast %113 : i32 to index
      %c0_100 = arith.constant 0 : index
      %242 = vector.load %arg5[%241, %c0_100] : memref<512x16xf32, #tpu.memory_space<vmem>>, vector<1x16xf32>
      %243 = arith.index_cast %240 : i32 to index
      %c0_101 = arith.constant 0 : index
      %244 = vector.load %arg6[%243, %c0_101] : memref<16x16xf32, #tpu.memory_space<vmem>>, vector<1x16xf32>
      tpu.vector_store %arg6[%243, %c0_101], %242 {strides = array<i32>} : memref<16x16xf32, #tpu.memory_space<vmem>>, vector<1x16xf32>,
      %245 = arith.index_cast %117 : i32 to index
      %c0_102 = arith.constant 0 : index
      %246 = vector.load %arg5[%245, %c0_102] : memref<512x16xf32, #tpu.memory_space<vmem>>, vector<1x16xf32>
      %247 = arith.index_cast %240 : i32 to index
      %c0_103 = arith.constant 0 : index
      %248 = vector.load %arg7[%247, %c0_103] : memref<16x16xf32, #tpu.memory_space<vmem>>, vector<1x16xf32>
      tpu.vector_store %arg7[%247, %c0_103], %246 {strides = array<i32>} : memref<16x16xf32, #tpu.memory_space<vmem>>, vector<1x16xf32>,
      %249 = arith.index_cast %121 : i32 to index
      %c0_104 = arith.constant 0 : index
      %250 = vector.load %arg5[%249, %c0_104] : memref<512x16xf32, #tpu.memory_space<vmem>>, vector<1x16xf32>
      %251 = arith.index_cast %240 : i32 to index
      %c0_105 = arith.constant 0 : index
      %252 = vector.load %arg8[%251, %c0_105] : memref<16x16xf32, #tpu.memory_space<vmem>>, vector<1x16xf32>
      tpu.vector_store %arg8[%251, %c0_105], %250 {strides = array<i32>} : memref<16x16xf32, #tpu.memory_space<vmem>>, vector<1x16xf32>,
      %253 = arith.index_cast %125 : i32 to index
      %c0_106 = arith.constant 0 : index
      %254 = vector.load %arg5[%253, %c0_106] : memref<512x16xf32, #tpu.memory_space<vmem>>, vector<1x16xf32>
      %255 = arith.index_cast %240 : i32 to index
      %c0_107 = arith.constant 0 : index
      %256 = vector.load %arg9[%255, %c0_107] : memref<16x16xf32, #tpu.memory_space<vmem>>, vector<1x16xf32>
      tpu.vector_store %arg9[%255, %c0_107], %254 {strides = array<i32>} : memref<16x16xf32, #tpu.memory_space<vmem>>, vector<1x16xf32>,
      %c3_i32_108 = arith.constant 3 : i32
      %257 = arith.addi %75, %c3_i32_108 : i32
      %258 = arith.index_cast %129 : i32 to index
      %c0_109 = arith.constant 0 : index
      %259 = vector.load %arg5[%258, %c0_109] : memref<512x16xf32, #tpu.memory_space<vmem>>, vector<1x16xf32>
      %260 = arith.index_cast %257 : i32 to index
      %c0_110 = arith.constant 0 : index
      %261 = vector.load %arg6[%260, %c0_110] : memref<16x16xf32, #tpu.memory_space<vmem>>, vector<1x16xf32>
      tpu.vector_store %arg6[%260, %c0_110], %259 {strides = array<i32>} : memref<16x16xf32, #tpu.memory_space<vmem>>, vector<1x16xf32>,
      %262 = arith.index_cast %133 : i32 to index
      %c0_111 = arith.constant 0 : index
      %263 = vector.load %arg5[%262, %c0_111] : memref<512x16xf32, #tpu.memory_space<vmem>>, vector<1x16xf32>
      %264 = arith.index_cast %257 : i32 to index
      %c0_112 = arith.constant 0 : index
      %265 = vector.load %arg7[%264, %c0_112] : memref<16x16xf32, #tpu.memory_space<vmem>>, vector<1x16xf32>
      tpu.vector_store %arg7[%264, %c0_112], %263 {strides = array<i32>} : memref<16x16xf32, #tpu.memory_space<vmem>>, vector<1x16xf32>,
      %266 = arith.index_cast %137 : i32 to index
      %c0_113 = arith.constant 0 : index
      %267 = vector.load %arg5[%266, %c0_113] : memref<512x16xf32, #tpu.memory_space<vmem>>, vector<1x16xf32>
      %268 = arith.index_cast %257 : i32 to index
      %c0_114 = arith.constant 0 : index
      %269 = vector.load %arg8[%268, %c0_114] : memref<16x16xf32, #tpu.memory_space<vmem>>, vector<1x16xf32>
      tpu.vector_store %arg8[%268, %c0_114], %267 {strides = array<i32>} : memref<16x16xf32, #tpu.memory_space<vmem>>, vector<1x16xf32>,
      %270 = arith.index_cast %141 : i32 to index
      %c0_115 = arith.constant 0 : index
      %271 = vector.load %arg5[%270, %c0_115] : memref<512x16xf32, #tpu.memory_space<vmem>>, vector<1x16xf32>
      %272 = arith.index_cast %257 : i32 to index
      %c0_116 = arith.constant 0 : index
      %273 = vector.load %arg9[%272, %c0_116] : memref<16x16xf32, #tpu.memory_space<vmem>>, vector<1x16xf32>
      tpu.vector_store %arg9[%272, %c0_116], %271 {strides = array<i32>} : memref<16x16xf32, #tpu.memory_space<vmem>>, vector<1x16xf32>,
      %c4_i32_117 = arith.constant 4 : i32
      %274 = arith.addi %75, %c4_i32_117 : i32
      %275 = arith.index_cast %145 : i32 to index
      %c0_118 = arith.constant 0 : index
      %276 = vector.load %arg5[%275, %c0_118] : memref<512x16xf32, #tpu.memory_space<vmem>>, vector<1x16xf32>
      %277 = arith.index_cast %274 : i32 to index
      %c0_119 = arith.constant 0 : index
      %278 = vector.load %arg6[%277, %c0_119] : memref<16x16xf32, #tpu.memory_space<vmem>>, vector<1x16xf32>
      tpu.vector_store %arg6[%277, %c0_119], %276 {strides = array<i32>} : memref<16x16xf32, #tpu.memory_space<vmem>>, vector<1x16xf32>,
      %279 = arith.index_cast %149 : i32 to index
      %c0_120 = arith.constant 0 : index
      %280 = vector.load %arg5[%279, %c0_120] : memref<512x16xf32, #tpu.memory_space<vmem>>, vector<1x16xf32>
      %281 = arith.index_cast %274 : i32 to index
      %c0_121 = arith.constant 0 : index
      %282 = vector.load %arg7[%281, %c0_121] : memref<16x16xf32, #tpu.memory_space<vmem>>, vector<1x16xf32>
      tpu.vector_store %arg7[%281, %c0_121], %280 {strides = array<i32>} : memref<16x16xf32, #tpu.memory_space<vmem>>, vector<1x16xf32>,
      %283 = arith.index_cast %153 : i32 to index
      %c0_122 = arith.constant 0 : index
      %284 = vector.load %arg5[%283, %c0_122] : memref<512x16xf32, #tpu.memory_space<vmem>>, vector<1x16xf32>
      %285 = arith.index_cast %274 : i32 to index
      %c0_123 = arith.constant 0 : index
      %286 = vector.load %arg8[%285, %c0_123] : memref<16x16xf32, #tpu.memory_space<vmem>>, vector<1x16xf32>
      tpu.vector_store %arg8[%285, %c0_123], %284 {strides = array<i32>} : memref<16x16xf32, #tpu.memory_space<vmem>>, vector<1x16xf32>,
      %287 = arith.index_cast %157 : i32 to index
      %c0_124 = arith.constant 0 : index
      %288 = vector.load %arg5[%287, %c0_124] : memref<512x16xf32, #tpu.memory_space<vmem>>, vector<1x16xf32>
      %289 = arith.index_cast %274 : i32 to index
      %c0_125 = arith.constant 0 : index
      %290 = vector.load %arg9[%289, %c0_125] : memref<16x16xf32, #tpu.memory_space<vmem>>, vector<1x16xf32>
      tpu.vector_store %arg9[%289, %c0_125], %288 {strides = array<i32>} : memref<16x16xf32, #tpu.memory_space<vmem>>, vector<1x16xf32>,
      %c5_i32 = arith.constant 5 : i32
      %291 = arith.addi %75, %c5_i32 : i32
      %292 = arith.index_cast %161 : i32 to index
      %c0_126 = arith.constant 0 : index
      %293 = vector.load %arg5[%292, %c0_126] : memref<512x16xf32, #tpu.memory_space<vmem>>, vector<1x16xf32>
      %294 = arith.index_cast %291 : i32 to index
      %c0_127 = arith.constant 0 : index
      %295 = vector.load %arg6[%294, %c0_127] : memref<16x16xf32, #tpu.memory_space<vmem>>, vector<1x16xf32>
      tpu.vector_store %arg6[%294, %c0_127], %293 {strides = array<i32>} : memref<16x16xf32, #tpu.memory_space<vmem>>, vector<1x16xf32>,
      %296 = arith.index_cast %165 : i32 to index
      %c0_128 = arith.constant 0 : index
      %297 = vector.load %arg5[%296, %c0_128] : memref<512x16xf32, #tpu.memory_space<vmem>>, vector<1x16xf32>
      %298 = arith.index_cast %291 : i32 to index
      %c0_129 = arith.constant 0 : index
      %299 = vector.load %arg7[%298, %c0_129] : memref<16x16xf32, #tpu.memory_space<vmem>>, vector<1x16xf32>
      tpu.vector_store %arg7[%298, %c0_129], %297 {strides = array<i32>} : memref<16x16xf32, #tpu.memory_space<vmem>>, vector<1x16xf32>,
      %300 = arith.index_cast %169 : i32 to index
      %c0_130 = arith.constant 0 : index
      %301 = vector.load %arg5[%300, %c0_130] : memref<512x16xf32, #tpu.memory_space<vmem>>, vector<1x16xf32>
      %302 = arith.index_cast %291 : i32 to index
      %c0_131 = arith.constant 0 : index
      %303 = vector.load %arg8[%302, %c0_131] : memref<16x16xf32, #tpu.memory_space<vmem>>, vector<1x16xf32>
      tpu.vector_store %arg8[%302, %c0_131], %301 {strides = array<i32>} : memref<16x16xf32, #tpu.memory_space<vmem>>, vector<1x16xf32>,
      %304 = arith.index_cast %173 : i32 to index
      %c0_132 = arith.constant 0 : index
      %305 = vector.load %arg5[%304, %c0_132] : memref<512x16xf32, #tpu.memory_space<vmem>>, vector<1x16xf32>
      %306 = arith.index_cast %291 : i32 to index
      %c0_133 = arith.constant 0 : index
      %307 = vector.load %arg9[%306, %c0_133] : memref<16x16xf32, #tpu.memory_space<vmem>>, vector<1x16xf32>
      tpu.vector_store %arg9[%306, %c0_133], %305 {strides = array<i32>} : memref<16x16xf32, #tpu.memory_space<vmem>>, vector<1x16xf32>,
      %c6_i32 = arith.constant 6 : i32
      %308 = arith.addi %75, %c6_i32 : i32
      %309 = arith.index_cast %177 : i32 to index
      %c0_134 = arith.constant 0 : index
      %310 = vector.load %arg5[%309, %c0_134] : memref<512x16xf32, #tpu.memory_space<vmem>>, vector<1x16xf32>
      %311 = arith.index_cast %308 : i32 to index
      %c0_135 = arith.constant 0 : index
      %312 = vector.load %arg6[%311, %c0_135] : memref<16x16xf32, #tpu.memory_space<vmem>>, vector<1x16xf32>
      tpu.vector_store %arg6[%311, %c0_135], %310 {strides = array<i32>} : memref<16x16xf32, #tpu.memory_space<vmem>>, vector<1x16xf32>,
      %313 = arith.index_cast %181 : i32 to index
      %c0_136 = arith.constant 0 : index
      %314 = vector.load %arg5[%313, %c0_136] : memref<512x16xf32, #tpu.memory_space<vmem>>, vector<1x16xf32>
      %315 = arith.index_cast %308 : i32 to index
      %c0_137 = arith.constant 0 : index
      %316 = vector.load %arg7[%315, %c0_137] : memref<16x16xf32, #tpu.memory_space<vmem>>, vector<1x16xf32>
      tpu.vector_store %arg7[%315, %c0_137], %314 {strides = array<i32>} : memref<16x16xf32, #tpu.memory_space<vmem>>, vector<1x16xf32>,
      %317 = arith.index_cast %185 : i32 to index
      %c0_138 = arith.constant 0 : index
      %318 = vector.load %arg5[%317, %c0_138] : memref<512x16xf32, #tpu.memory_space<vmem>>, vector<1x16xf32>
      %319 = arith.index_cast %308 : i32 to index
      %c0_139 = arith.constant 0 : index
      %320 = vector.load %arg8[%319, %c0_139] : memref<16x16xf32, #tpu.memory_space<vmem>>, vector<1x16xf32>
      tpu.vector_store %arg8[%319, %c0_139], %318 {strides = array<i32>} : memref<16x16xf32, #tpu.memory_space<vmem>>, vector<1x16xf32>,
      %321 = arith.index_cast %189 : i32 to index
      %c0_140 = arith.constant 0 : index
      %322 = vector.load %arg5[%321, %c0_140] : memref<512x16xf32, #tpu.memory_space<vmem>>, vector<1x16xf32>
      %323 = arith.index_cast %308 : i32 to index
      %c0_141 = arith.constant 0 : index
      %324 = vector.load %arg9[%323, %c0_141] : memref<16x16xf32, #tpu.memory_space<vmem>>, vector<1x16xf32>
      tpu.vector_store %arg9[%323, %c0_141], %322 {strides = array<i32>} : memref<16x16xf32, #tpu.memory_space<vmem>>, vector<1x16xf32>,
      %c7_i32 = arith.constant 7 : i32
      %325 = arith.addi %75, %c7_i32 : i32
      %326 = arith.index_cast %193 : i32 to index
      %c0_142 = arith.constant 0 : index
      %327 = vector.load %arg5[%326, %c0_142] : memref<512x16xf32, #tpu.memory_space<vmem>>, vector<1x16xf32>
      %328 = arith.index_cast %325 : i32 to index
      %c0_143 = arith.constant 0 : index
      %329 = vector.load %arg6[%328, %c0_143] : memref<16x16xf32, #tpu.memory_space<vmem>>, vector<1x16xf32>
      tpu.vector_store %arg6[%328, %c0_143], %327 {strides = array<i32>} : memref<16x16xf32, #tpu.memory_space<vmem>>, vector<1x16xf32>,
      %330 = arith.index_cast %197 : i32 to index
      %c0_144 = arith.constant 0 : index
      %331 = vector.load %arg5[%330, %c0_144] : memref<512x16xf32, #tpu.memory_space<vmem>>, vector<1x16xf32>
      %332 = arith.index_cast %325 : i32 to index
      %c0_145 = arith.constant 0 : index
      %333 = vector.load %arg7[%332, %c0_145] : memref<16x16xf32, #tpu.memory_space<vmem>>, vector<1x16xf32>
      tpu.vector_store %arg7[%332, %c0_145], %331 {strides = array<i32>} : memref<16x16xf32, #tpu.memory_space<vmem>>, vector<1x16xf32>,
      %334 = arith.index_cast %201 : i32 to index
      %c0_146 = arith.constant 0 : index
      %335 = vector.load %arg5[%334, %c0_146] : memref<512x16xf32, #tpu.memory_space<vmem>>, vector<1x16xf32>
      %336 = arith.index_cast %325 : i32 to index
      %c0_147 = arith.constant 0 : index
      %337 = vector.load %arg8[%336, %c0_147] : memref<16x16xf32, #tpu.memory_space<vmem>>, vector<1x16xf32>
      tpu.vector_store %arg8[%336, %c0_147], %335 {strides = array<i32>} : memref<16x16xf32, #tpu.memory_space<vmem>>, vector<1x16xf32>,
      %338 = arith.index_cast %205 : i32 to index
      %c0_148 = arith.constant 0 : index
      %339 = vector.load %arg5[%338, %c0_148] : memref<512x16xf32, #tpu.memory_space<vmem>>, vector<1x16xf32>
      %340 = arith.index_cast %325 : i32 to index
      %c0_149 = arith.constant 0 : index
      %341 = vector.load %arg9[%340, %c0_149] : memref<16x16xf32, #tpu.memory_space<vmem>>, vector<1x16xf32>
      tpu.vector_store %arg9[%340, %c0_149], %339 {strides = array<i32>} : memref<16x16xf32, #tpu.memory_space<vmem>>, vector<1x16xf32>,
    }
    %c2_i32_2 = arith.constant 2 : i32
    %c0 = arith.constant 0 : index
    %c0_3 = arith.constant 0 : index
    %5 = vector.load %arg2[%c0, %c0_3] : memref<16x8xf32, #tpu.memory_space<vmem>>, vector<16x8xf32>
    %6 = vector.extract_strided_slice %5 {offsets = [0, 0], sizes = [16, 1], strides = [1, 1]} : vector<16x8xf32> to vector<16x1xf32>
    %7 = vector.extract_strided_slice %5 {offsets = [0, 1], sizes = [16, 1], strides = [1, 1]} : vector<16x8xf32> to vector<16x1xf32>
    %8 = vector.extract_strided_slice %5 {offsets = [0, 2], sizes = [16, 1], strides = [1, 1]} : vector<16x8xf32> to vector<16x1xf32>
    %9 = vector.extract_strided_slice %5 {offsets = [0, 3], sizes = [16, 1], strides = [1, 1]} : vector<16x8xf32> to vector<16x1xf32>
    %10 = vector.extract_strided_slice %5 {offsets = [0, 4], sizes = [16, 1], strides = [1, 1]} : vector<16x8xf32> to vector<16x1xf32>
    %11 = vector.extract_strided_slice %5 {offsets = [0, 5], sizes = [16, 1], strides = [1, 1]} : vector<16x8xf32> to vector<16x1xf32>
    %12 = vector.extract_strided_slice %5 {offsets = [0, 6], sizes = [16, 1], strides = [1, 1]} : vector<16x8xf32> to vector<16x1xf32>
    %13 = arith.fptosi %12 : vector<16x1xf32> to vector<16x1xi32>
    %14 = vector.extract_strided_slice %5 {offsets = [0, 7], sizes = [16, 1], strides = [1, 1]} : vector<16x8xf32> to vector<16x1xf32>
    %15 = arith.fptosi %14 : vector<16x1xf32> to vector<16x1xi32>
    %16 = tpu.iota {dimensions = array<i32: 1>} : vector<16x16xi32>
    %17 = vector.broadcast %13 : vector<16x1xi32> to vector<16x16xi32>
    %18 = arith.cmpi eq, %16, %17 : vector<16x16xi32>
    %cst = arith.constant 0.000000e+00 : f32
    %19 = vector.shape_cast %10 : vector<16x1xf32> to vector<16x1xf32>
    %20 = vector.broadcast %19 : vector<16x1xf32> to vector<16x16xf32>
    %21 = vector.broadcast %cst : f32 to vector<16x16xf32>
    %22 = arith.select %18, %20, %21 : vector<16x16xi1>, vector<16x16xf32>
    %23 = vector.broadcast %15 : vector<16x1xi32> to vector<16x16xi32>
    %24 = arith.cmpi eq, %16, %23 : vector<16x16xi32>
    %cst_4 = arith.constant 0.000000e+00 : f32
    %25 = vector.shape_cast %11 : vector<16x1xf32> to vector<16x1xf32>
    %26 = vector.broadcast %25 : vector<16x1xf32> to vector<16x16xf32>
    %27 = vector.broadcast %cst_4 : f32 to vector<16x16xf32>
    %28 = arith.select %24, %26, %27 : vector<16x16xi1>, vector<16x16xf32>
    %29 = arith.addf %22, %28 : vector<16x16xf32>
    %30 = arith.mulf %6, %8 : vector<16x1xf32>
    %c0_5 = arith.constant 0 : index
    %c0_6 = arith.constant 0 : index
    %31 = vector.load %arg6[%c0_5, %c0_6] : memref<16x16xf32, #tpu.memory_space<vmem>>, vector<16x16xf32>
    %32 = vector.broadcast %30 : vector<16x1xf32> to vector<16x16xf32>
    %33 = arith.mulf %32, %31 : vector<16x16xf32>
    %34 = arith.mulf %6, %9 : vector<16x1xf32>
    %c0_7 = arith.constant 0 : index
    %c0_8 = arith.constant 0 : index
    %35 = vector.load %arg7[%c0_7, %c0_8] : memref<16x16xf32, #tpu.memory_space<vmem>>, vector<16x16xf32>
    %36 = vector.broadcast %34 : vector<16x1xf32> to vector<16x16xf32>
    %37 = arith.mulf %36, %35 : vector<16x16xf32>
    %38 = arith.addf %33, %37 : vector<16x16xf32>
    %39 = arith.mulf %7, %8 : vector<16x1xf32>
    %c0_9 = arith.constant 0 : index
    %c0_10 = arith.constant 0 : index
    %40 = vector.load %arg8[%c0_9, %c0_10] : memref<16x16xf32, #tpu.memory_space<vmem>>, vector<16x16xf32>
    %41 = vector.broadcast %39 : vector<16x1xf32> to vector<16x16xf32>
    %42 = arith.mulf %41, %40 : vector<16x16xf32>
    %43 = arith.addf %38, %42 : vector<16x16xf32>
    %44 = arith.mulf %7, %9 : vector<16x1xf32>
    %c0_11 = arith.constant 0 : index
    %c0_12 = arith.constant 0 : index
    %45 = vector.load %arg9[%c0_11, %c0_12] : memref<16x16xf32, #tpu.memory_space<vmem>>, vector<16x16xf32>
    %46 = vector.broadcast %44 : vector<16x1xf32> to vector<16x16xf32>
    %47 = arith.mulf %46, %45 : vector<16x16xf32>
    %48 = arith.addf %43, %47 : vector<16x16xf32>
    %49 = arith.mulf %48, %29 : vector<16x16xf32>
    %cst_13 = arith.constant dense<0.000000e+00> : vector<16xf32>
    %50 = vector.multi_reduction <add>, %49, %cst_13 [1] : vector<16x16xf32> to vector<16xf32>
    %51 = vector.shape_cast %50 : vector<16xf32> to vector<16x1xf32>
    %52 = math.absf %51 : vector<16x1xf32>
    %cst_14 = arith.constant 1.000000e+00 : f32
    %53 = vector.broadcast %cst_14 : f32 to vector<16x1xf32>
    %54 = arith.cmpf ole, %52, %53 : vector<16x1xf32>
    %cst_15 = arith.constant 5.000000e-01 : f32
    %55 = vector.broadcast %cst_15 : f32 to vector<16x1xf32>
    %56 = arith.mulf %55, %51 : vector<16x1xf32>
    %57 = arith.mulf %56, %51 : vector<16x1xf32>
    %cst_16 = arith.constant 5.000000e-01 : f32
    %58 = vector.broadcast %cst_16 : f32 to vector<16x1xf32>
    %59 = arith.subf %52, %58 : vector<16x1xf32>
    %60 = arith.select %54, %57, %59 : vector<16x1xi1>, vector<16x1xf32>
    %61 = tpu.iota {dimensions = array<i32: 0>} : vector<16x1xi32>
    %62 = vector.broadcast %3 : i32 to vector<16x1xi32>
    %63 = arith.addi %61, %62 : vector<16x1xi32>
    %c16_i32_17 = arith.constant 16 : i32
    %64 = vector.broadcast %c16_i32_17 : i32 to vector<16x1xi32>
    %65 = arith.cmpi slt, %63, %64 : vector<16x1xi32>
    %66 = arith.extui %65 : vector<16x1xi1> to vector<16x1xi32>
    %67 = arith.sitofp %66 : vector<16x1xi32> to vector<16x1xf32>
    %68 = arith.mulf %60, %67 : vector<16x1xf32>
    %cst_18 = arith.constant dense<0.000000e+00> : vector<1xf32>
    %69 = vector.multi_reduction <add>, %68, %cst_18 [0] : vector<16x1xf32> to vector<1xf32>
    %70 = vector.shape_cast %69 : vector<1xf32> to vector<1x1xf32>
    %71 = arith.index_cast %arg0 : i32 to index
    %c0_19 = arith.constant 0 : index
    %72 = vector.load %arg4[%71, %c0_19] : memref<1x1xf32, #tpu.memory_space<vmem>>, vector<1x1xf32>
    tpu.vector_store %arg4[%71, %c0_19], %70 {strides = array<i32>} : memref<1x1xf32, #tpu.memory_space<vmem>>, vector<1x1xf32>,
    return
  }
  func.func @transform_0(%arg0: i32, %arg1: memref<64xi32, #tpu.memory_space<smem>>) -> (i32, i32) {
    %c0_i32 = arith.constant 0 : i32
    %c0_i32_0 = arith.constant 0 : i32
    return %arg0, %c0_i32 : i32, i32
  }
  func.func @transform_2(%arg0: i32, %arg1: memref<64xi32, #tpu.memory_space<smem>>) -> (i32, i32) {
    %c0_i32 = arith.constant 0 : i32
    %c0_i32_0 = arith.constant 0 : i32
    %c0_i32_1 = arith.constant 0 : i32
    return %c0_i32, %c0_i32_0 : i32, i32
  }
}

</mosaic_0001>

<llo_original>
// kernel: tpu_custom_call.1
$region0: #{tpu_custom_call.1}
  #allocation0 [shape = 'u32[]', space=smem, size = 0x4, offset = 0x4, fixed_abs, tag = 'smem constant byte address 0x4 - core index']
  #allocation1 [shape = 'u32[144,128]{1,0:T(1,128)}', space=vmem, size = 0x12000, scoped, tag = 'internal scratch']
  #allocation2 [shape = 'f32[512,16]{1,0:T(8,128)}', space=vmem, size = 0x40000, scoped, tag = 'scratch operand']
  #allocation3 [shape = 'f32[16,16]{1,0:T(8,128)}', space=vmem, size = 0x2000, scoped, tag = 'scratch operand']
  #allocation4 [shape = 'f32[16,16]{1,0:T(8,128)}', space=vmem, size = 0x2000, scoped, tag = 'scratch operand']
  #allocation5 [shape = 'f32[16,16]{1,0:T(8,128)}', space=vmem, size = 0x2000, scoped, tag = 'scratch operand']
  #allocation6 [shape = 'f32[16,16]{1,0:T(8,128)}', space=vmem, size = 0x2000, scoped, tag = 'scratch operand']
  #allocation7 [shape = 's32[1]{0}', space=sflag, size = 0x4, scoped, tag = 'scratch operand']
  #allocation8 [shape = 's32[1]{0}', space=sflag, size = 0x4, scoped, tag = 'scoped memory for tpu_custom_call.1']
  #allocation9 [shape = 'u8[512]{0}', space=smem, size = 0x200, scoped, tag = 'prefetched SMEM operand 0']
  #allocation12 [shape = 's32[]', space=sflag, size = 0x4, offset = 0, fixed_abs, tag = 'sflag constant byte address 0x0 - dummy sync flag']
  %s0 = inlined_call_operand.vmem [shape: s32[64], index: 0, kind: input, shape index: {}]
  %s1 = inlined_call_operand.vmem [shape: f32[16,8], index: 1, kind: input, shape index: {}]
  %s2 = inlined_call_operand.vmem [shape: f32[512,16], index: 2, kind: input, shape index: {}]
  %s3 = inlined_call_operand.hbm [shape: f32[1,1], index: 3, kind: output, shape index: {}]
  %s4 = sld [smem:[#allocation0]]
  $region59: #{tpu_custom_call.1} parent=0
    _
  %s6 = ssub.s32 1, %s4
  %s7 = scalar_select 0, %s6, %s4
  %s8 = sshll.u32 %s0, 4
  %s9 = int_to_ptr.vmem [resolvable:$true] %s8
  %11 = dma.vmem_to_smem %s9, 16, [#allocation9], [#allocation8]
  %12 = dma.done [#allocation8], 16
  %13 = sfence
  $region1: #{tpu_custom_call.1} parent=0
    #allocation10 [shape = 'u8[512]{0}', space=vmem, size = 0x400, scoped, tag = 'output window, operand 0, single buffered']
    #allocation11 [shape = 's32[1]{0}', space=sflag, size = 0x4, scoped, tag = 'scoped memory for tpu_custom_call.1']
    %14 = vsyncpa [#allocation11], 0
    // Predicated region
    $region2: #{tpu_custom_call.1} parent=1 // pred_check
      _
    $region3: #{tpu_custom_call.1} parent=1 // pred_check_branch
      %16 = sbr.rel (0) target = $region5
    $region4: #{tpu_custom_call.1} parent=1 // pred_region
      _
    $region5: #{tpu_custom_call.1} parent=1 // pred_fallthru
      _
    %p17 = scmp.eq.s32.totalorder 0, 0
    // Predicated region
    $region6: #{tpu_custom_call.1} parent=1 // pred_check
      %p18 = pneg %p17
    $region7: #{tpu_custom_call.1} parent=1 // pred_check_branch
      %20 = sbr.rel (%p18) target = $region9
    $region8: #{tpu_custom_call.1} parent=1 // pred_region
      %p22 = scmp.lt.u32.totalorder 512, 8
      %p23 = pneg %p22
      // Predicated region
      $region10: #{tpu_custom_call.1} parent=8 // pred_check
        _
      $region11: #{tpu_custom_call.1} parent=8 // pred_check_branch
        %25 = sbr.rel (%p22) target = $region13
      $region12: #{tpu_custom_call.1} parent=8 // pred_region
        %s40 = sand.u32 512, 7
        %p41 = scmp.eq.s32.totalorder %s40, 0
        // Predicated region
        $region25: #{tpu_custom_call.1} parent=12 // pred_check
          %p42 = pneg %p41
        $region26: #{tpu_custom_call.1} parent=12 // pred_check_branch
          %44 = sbr.rel (%p42) target = $region28
        $region27: #{tpu_custom_call.1} parent=12 // pred_region
          loop: start=0, step=1, limit=1
          $region29: #{tpu_custom_call.1} parent=27 // loop_pre_header
            _
          $region30: #{tpu_custom_call.1} parent=27 // loop_header
            %s46 = sphi 0, %s50
            %p47 = scmp.ge.s32.totalorder %s46, 1
            %s51 = sphi %s2, %s2
            %s52 = sphi [#allocation2], [#allocation2]
          $region31: #{tpu_custom_call.1} parent=27 // loop_header_branch
            %49 = sbr.rel (%p47) target = $region35
          $region32: #{tpu_custom_call.1} parent=27 // loop_body
            %v53 = vld [vmem:[%s51] sm:$0xff]
            %54 = vst [vmem:[%s52] sm:$0xff] %v53
            %v55 = vld [vmem:[%s51 + $0x8] sm:$0xff]
            %56 = vst [vmem:[%s52 + $0x8] sm:$0xff] %v55
            %v57 = vld [vmem:[%s51 + $0x10] sm:$0xff]
            %58 = vst [vmem:[%s52 + $0x10] sm:$0xff] %v57
            %v59 = vld [vmem:[%s51 + $0x18] sm:$0xff]
            %60 = vst [vmem:[%s52 + $0x18] sm:$0xff] %v59
            %v61 = vld [vmem:[%s51 + $0x20] sm:$0xff]
            %62 = vst [vmem:[%s52 + $0x20] sm:$0xff] %v61
            %v63 = vld [vmem:[%s51 + $0x28] sm:$0xff]
            %64 = vst [vmem:[%s52 + $0x28] sm:$0xff] %v63
            %v65 = vld [vmem:[%s51 + $0x30] sm:$0xff]
            %66 = vst [vmem:[%s52 + $0x30] sm:$0xff] %v65
            %v67 = vld [vmem:[%s51 + $0x38] sm:$0xff]
            %68 = vst [vmem:[%s52 + $0x38] sm:$0xff] %v67
            %v69 = vld [vmem:[%s51 + $0x40] sm:$0xff]
            %70 = vst [vmem:[%s52 + $0x40] sm:$0xff] %v69
            %v71 = vld [vmem:[%s51 + $0x48] sm:$0xff]
            %72 = vst [vmem:[%s52 + $0x48] sm:$0xff] %v71
            %v73 = vld [vmem:[%s51 + $0x50] sm:$0xff]
            %74 = vst [vmem:[%s52 + $0x50] sm:$0xff] %v73
            %v75 = vld [vmem:[%s51 + $0x58] sm:$0xff]
            %76 = vst [vmem:[%s52 + $0x58] sm:$0xff] %v75
            %v77 = vld [vmem:[%s51 + $0x60] sm:$0xff]
            %78 = vst [vmem:[%s52 + $0x60] sm:$0xff] %v77
            %v79 = vld [vmem:[%s51 + $0x68] sm:$0xff]
            %80 = vst [vmem:[%s52 + $0x68] sm:$0xff] %v79
            %v81 = vld [vmem:[%s51 + $0x70] sm:$0xff]
            %82 = vst [vmem:[%s52 + $0x70] sm:$0xff] %v81
            %v83 = vld [vmem:[%s51 + $0x78] sm:$0xff]
            %84 = vst [vmem:[%s52 + $0x78] sm:$0xff] %v83
            %v85 = vld [vmem:[%s51 + $0x80] sm:$0xff]
            %86 = vst [vmem:[%s52 + $0x80] sm:$0xff] %v85
            %v87 = vld [vmem:[%s51 + $0x88] sm:$0xff]
            %88 = vst [vmem:[%s52 + $0x88] sm:$0xff] %v87
            %v89 = vld [vmem:[%s51 + $0x90] sm:$0xff]
            %90 = vst [vmem:[%s52 + $0x90] sm:$0xff] %v89
            %v91 = vld [vmem:[%s51 + $0x98] sm:$0xff]
            %92 = vst [vmem:[%s52 + $0x98] sm:$0xff] %v91
            %v93 = vld [vmem:[%s51 + $0xa0] sm:$0xff]
            %94 = vst [vmem:[%s52 + $0xa0] sm:$0xff] %v93
            %v95 = vld [vmem:[%s51 + $0xa8] sm:$0xff]
            %96 = vst [vmem:[%s52 + $0xa8] sm:$0xff] %v95
            %v97 = vld [vmem:[%s51 + $0xb0] sm:$0xff]
            %98 = vst [vmem:[%s52 + $0xb0] sm:$0xff] %v97
            %v99 = vld [vmem:[%s51 + $0xb8] sm:$0xff]
            %100 = vst [vmem:[%s52 + $0xb8] sm:$0xff] %v99
            %v101 = vld [vmem:[%s51 + $0xc0] sm:$0xff]
            %102 = vst [vmem:[%s52 + $0xc0] sm:$0xff] %v101
            %v103 = vld [vmem:[%s51 + $0xc8] sm:$0xff]
            %104 = vst [vmem:[%s52 + $0xc8] sm:$0xff] %v103
            %v105 = vld [vmem:[%s51 + $0xd0] sm:$0xff]
            %106 = vst [vmem:[%s52 + $0xd0] sm:$0xff] %v105
            %v107 = vld [vmem:[%s51 + $0xd8] sm:$0xff]
            %108 = vst [vmem:[%s52 + $0xd8] sm:$0xff] %v107
            %v109 = vld [vmem:[%s51 + $0xe0] sm:$0xff]
            %110 = vst [vmem:[%s52 + $0xe0] sm:$0xff] %v109
            %v111 = vld [vmem:[%s51 + $0xe8] sm:$0xff]
            %112 = vst [vmem:[%s52 + $0xe8] sm:$0xff] %v111
            %v113 = vld [vmem:[%s51 + $0xf0] sm:$0xff]
            %114 = vst [vmem:[%s52 + $0xf0] sm:$0xff] %v113
            %v115 = vld [vmem:[%s51 + $0xf8] sm:$0xff]
            %116 = vst [vmem:[%s52 + $0xf8] sm:$0xff] %v115
            %v117 = vld [vmem:[%s51 + $0x100] sm:$0xff]
            %118 = vst [vmem:[%s52 + $0x100] sm:$0xff] %v117
            %v119 = vld [vmem:[%s51 + $0x108] sm:$0xff]
            %120 = vst [vmem:[%s52 + $0x108] sm:$0xff] %v119
            %v121 = vld [vmem:[%s51 + $0x110] sm:$0xff]
            %122 = vst [vmem:[%s52 + $0x110] sm:$0xff] %v121
            %v123 = vld [vmem:[%s51 + $0x118] sm:$0xff]
            %124 = vst [vmem:[%s52 + $0x118] sm:$0xff] %v123
            %v125 = vld [vmem:[%s51 + $0x120] sm:$0xff]
            %126 = vst [vmem:[%s52 + $0x120] sm:$0xff] %v125
            %v127 = vld [vmem:[%s51 + $0x128] sm:$0xff]
            %128 = vst [vmem:[%s52 + $0x128] sm:$0xff] %v127
            %v129 = vld [vmem:[%s51 + $0x130] sm:$0xff]
            %130 = vst [vmem:[%s52 + $0x130] sm:$0xff] %v129
            %v131 = vld [vmem:[%s51 + $0x138] sm:$0xff]
            %132 = vst [vmem:[%s52 + $0x138] sm:$0xff] %v131
            %v133 = vld [vmem:[%s51 + $0x140] sm:$0xff]
            %134 = vst [vmem:[%s52 + $0x140] sm:$0xff] %v133
            %v135 = vld [vmem:[%s51 + $0x148] sm:$0xff]
            %136 = vst [vmem:[%s52 + $0x148] sm:$0xff] %v135
            %v137 = vld [vmem:[%s51 + $0x150] sm:$0xff]
            %138 = vst [vmem:[%s52 + $0x150] sm:$0xff] %v137
            %v139 = vld [vmem:[%s51 + $0x158] sm:$0xff]
            %140 = vst [vmem:[%s52 + $0x158] sm:$0xff] %v139
            %v141 = vld [vmem:[%s51 + $0x160] sm:$0xff]
            %142 = vst [vmem:[%s52 + $0x160] sm:$0xff] %v141
            %v143 = vld [vmem:[%s51 + $0x168] sm:$0xff]
            %144 = vst [vmem:[%s52 + $0x168] sm:$0xff] %v143
            %v145 = vld [vmem:[%s51 + $0x170] sm:$0xff]
            %146 = vst [vmem:[%s52 + $0x170] sm:$0xff] %v145
            %v147 = vld [vmem:[%s51 + $0x178] sm:$0xff]
            %148 = vst [vmem:[%s52 + $0x178] sm:$0xff] %v147
            %v149 = vld [vmem:[%s51 + $0x180] sm:$0xff]
            %150 = vst [vmem:[%s52 + $0x180] sm:$0xff] %v149
            %v151 = vld [vmem:[%s51 + $0x188] sm:$0xff]
            %152 = vst [vmem:[%s52 + $0x188] sm:$0xff] %v151
            %v153 = vld [vmem:[%s51 + $0x190] sm:$0xff]
            %154 = vst [vmem:[%s52 + $0x190] sm:$0xff] %v153
            %v155 = vld [vmem:[%s51 + $0x198] sm:$0xff]
            %156 = vst [vmem:[%s52 + $0x198] sm:$0xff] %v155
            %v157 = vld [vmem:[%s51 + $0x1a0] sm:$0xff]
            %158 = vst [vmem:[%s52 + $0x1a0] sm:$0xff] %v157
            %v159 = vld [vmem:[%s51 + $0x1a8] sm:$0xff]
            %160 = vst [vmem:[%s52 + $0x1a8] sm:$0xff] %v159
            %v161 = vld [vmem:[%s51 + $0x1b0] sm:$0xff]
            %162 = vst [vmem:[%s52 + $0x1b0] sm:$0xff] %v161
            %v163 = vld [vmem:[%s51 + $0x1b8] sm:$0xff]
            %164 = vst [vmem:[%s52 + $0x1b8] sm:$0xff] %v163
            %v165 = vld [vmem:[%s51 + $0x1c0] sm:$0xff]
            %166 = vst [vmem:[%s52 + $0x1c0] sm:$0xff] %v165
            %v167 = vld [vmem:[%s51 + $0x1c8] sm:$0xff]
            %168 = vst [vmem:[%s52 + $0x1c8] sm:$0xff] %v167
            %v169 = vld [vmem:[%s51 + $0x1d0] sm:$0xff]
            %170 = vst [vmem:[%s52 + $0x1d0] sm:$0xff] %v169
            %v171 = vld [vmem:[%s51 + $0x1d8] sm:$0xff]
            %172 = vst [vmem:[%s52 + $0x1d8] sm:$0xff] %v171
            %v173 = vld [vmem:[%s51 + $0x1e0] sm:$0xff]
            %174 = vst [vmem:[%s52 + $0x1e0] sm:$0xff] %v173
            %v175 = vld [vmem:[%s51 + $0x1e8] sm:$0xff]
            %176 = vst [vmem:[%s52 + $0x1e8] sm:$0xff] %v175
            %v177 = vld [vmem:[%s51 + $0x1f0] sm:$0xff]
            %178 = vst [vmem:[%s52 + $0x1f0] sm:$0xff] %v177
            %v179 = vld [vmem:[%s51 + $0x1f8] sm:$0xff]
            %180 = vst [vmem:[%s52 + $0x1f8] sm:$0xff] %v179
          $region33: #{tpu_custom_call.1} parent=27 // loop_footer
            %s50 = sadd.s32 1, %s46
          $region34: #{tpu_custom_call.1} parent=27 // loop_footer_branch
            %45 = sbr.rel target = $region30
          $region35: #{tpu_custom_call.1} parent=27 // loop_exit
            _
        $region28: #{tpu_custom_call.1} parent=12 // pred_fallthru
          _
        %p181 = pneg %p41
        // Predicated region
        $region36: #{tpu_custom_call.1} parent=12 // pred_check
          _
        $region37: #{tpu_custom_call.1} parent=12 // pred_check_branch
          %183 = sbr.rel (%p41) target = $region39
        $region38: #{tpu_custom_call.1} parent=12 // pred_region
          %s184 = sand.u32 512, 7
        $region39: #{tpu_custom_call.1} parent=12 // pred_fallthru
          _
      $region13: #{tpu_custom_call.1} parent=8 // pred_fallthru
        _
      // Predicated region
      $region14: #{tpu_custom_call.1} parent=8 // pred_check
        %p26 = pneg %p22
      $region15: #{tpu_custom_call.1} parent=8 // pred_check_branch
        %28 = sbr.rel (%p26) target = $region17
      $region16: #{tpu_custom_call.1} parent=8 // pred_region
        %s29 = sshllo.u32 0, 512
        loop: start=0, step=1, limit=1
        $region18: #{tpu_custom_call.1} parent=16 // loop_pre_header
          _
        $region19: #{tpu_custom_call.1} parent=16 // loop_header
          %s31 = sphi 0, %s35
          %p32 = scmp.ge.s32.totalorder %s31, 1
          %s36 = sphi %s2, %s2
          %s37 = sphi [#allocation2], [#allocation2]
        $region20: #{tpu_custom_call.1} parent=16 // loop_header_branch
          %34 = sbr.rel (%p32) target = $region24
        $region21: #{tpu_custom_call.1} parent=16 // loop_body
          %v38 = vld [vmem:[%s36] sm:%s29]
          %39 = vst [vmem:[%s37] sm:%s29] %v38
        $region22: #{tpu_custom_call.1} parent=16 // loop_footer
          %s35 = sadd.s32 1, %s31
        $region23: #{tpu_custom_call.1} parent=16 // loop_footer_branch
          %30 = sbr.rel target = $region19
        $region24: #{tpu_custom_call.1} parent=16 // loop_exit
          _
      $region17: #{tpu_custom_call.1} parent=8 // pred_fallthru
        _
      // Predicated region
      $region40: #{tpu_custom_call.1} parent=8 // pred_check
        _
      $region41: #{tpu_custom_call.1} parent=8 // pred_check_branch
        %187 = sbr.rel (0) target = $region43
      $region42: #{tpu_custom_call.1} parent=8 // pred_region
        %188 = vsyncadd [#allocation7], 8192
      $region43: #{tpu_custom_call.1} parent=8 // pred_fallthru
        _
      %s189 = smul.u32 512, 1
      %s190 = sshll.u32 %s189, 4
      %191 = dma.done [#allocation7], %s190
    $region9: #{tpu_custom_call.1} parent=1 // pred_fallthru
      _
    %s192 = smul.u32 0, 16
    loop: start=0, step=1, limit=2
    $region44: #{tpu_custom_call.1} parent=1 // loop_pre_header
      _
    $region45: #{tpu_custom_call.1} parent=1 // loop_header
      %s194 = sphi 0, %s198
      %p195 = scmp.ge.s32.totalorder %s194, 2
    $region46: #{tpu_custom_call.1} parent=1 // loop_header_branch
      %197 = sbr.rel (%p195) target = $region50
    $region47: #{tpu_custom_call.1} parent=1 // loop_body
      %s199 = smul.u32 %s194, 8
      %s200 = sadd.s32 %s192, %s199
      %s201 = smul.u32 %s200, 4
      %s202 = sld [smem:[#allocation9 + %s201]]
      %s203 = sadd.s32 %s201, 1
      %s204 = sld [smem:[#allocation9 + %s203]]
      %s205 = sadd.s32 %s201, 2
      %s206 = sld [smem:[#allocation9 + %s205]]
      %s207 = sadd.s32 %s201, 3
      %s208 = sld [smem:[#allocation9 + %s207]]
      %s209 = sadd.s32 %s201, 4
      %s210 = sld [smem:[#allocation9 + %s209]]
      %s211 = sadd.s32 %s201, 5
      %s212 = sld [smem:[#allocation9 + %s211]]
      %s213 = sadd.s32 %s201, 6
      %s214 = sld [smem:[#allocation9 + %s213]]
      %s215 = sadd.s32 %s201, 7
      %s216 = sld [smem:[#allocation9 + %s215]]
      %s217 = sadd.s32 %s201, 8
      %s218 = sld [smem:[#allocation9 + %s217]]
      %s219 = sadd.s32 %s201, 9
      %s220 = sld [smem:[#allocation9 + %s219]]
      %s221 = sadd.s32 %s201, 10
      %s222 = sld [smem:[#allocation9 + %s221]]
      %s223 = sadd.s32 %s201, 11
      %s224 = sld [smem:[#allocation9 + %s223]]
      %s225 = sadd.s32 %s201, 12
      %s226 = sld [smem:[#allocation9 + %s225]]
      %s227 = sadd.s32 %s201, 13
      %s228 = sld [smem:[#allocation9 + %s227]]
      %s229 = sadd.s32 %s201, 14
      %s230 = sld [smem:[#allocation9 + %s229]]
      %s231 = sadd.s32 %s201, 15
      %s232 = sld [smem:[#allocation9 + %s231]]
      %s233 = sadd.s32 %s201, 16
      %s234 = sld [smem:[#allocation9 + %s233]]
      %s235 = sadd.s32 %s201, 17
      %s236 = sld [smem:[#allocation9 + %s235]]
      %s237 = sadd.s32 %s201, 18
      %s238 = sld [smem:[#allocation9 + %s237]]
      %s239 = sadd.s32 %s201, 19
      %s240 = sld [smem:[#allocation9 + %s239]]
      %s241 = sadd.s32 %s201, 20
      %s242 = sld [smem:[#allocation9 + %s241]]
      %s243 = sadd.s32 %s201, 21
      %s244 = sld [smem:[#allocation9 + %s243]]
      %s245 = sadd.s32 %s201, 22
      %s246 = sld [smem:[#allocation9 + %s245]]
      %s247 = sadd.s32 %s201, 23
      %s248 = sld [smem:[#allocation9 + %s247]]
      %s249 = sadd.s32 %s201, 24
      %s250 = sld [smem:[#allocation9 + %s249]]
      %s251 = sadd.s32 %s201, 25
      %s252 = sld [smem:[#allocation9 + %s251]]
      %s253 = sadd.s32 %s201, 26
      %s254 = sld [smem:[#allocation9 + %s253]]
      %s255 = sadd.s32 %s201, 27
      %s256 = sld [smem:[#allocation9 + %s255]]
      %s257 = sadd.s32 %s201, 28
      %s258 = sld [smem:[#allocation9 + %s257]]
      %s259 = sadd.s32 %s201, 29
      %s260 = sld [smem:[#allocation9 + %s259]]
      %s261 = sadd.s32 %s201, 30
      %s262 = sld [smem:[#allocation9 + %s261]]
      %s263 = sadd.s32 %s201, 31
      %s264 = sld [smem:[#allocation9 + %s263]]
      %s265 = scalar_lea.vmem [#allocation2], %s202
      %v266 = vld [vmem:[%s265] sm:$0x1]
      %s267 = scalar_lea.vmem [#allocation3], %s199
      %vm268 = vcmask 122880
      %269 = vst.msk [vmem:[%s267] sm:$0x1] %vm268, %v266
      %s270 = scalar_lea.vmem [#allocation2], %s204
      %v271 = vld [vmem:[%s270] sm:$0x1]
      %s272 = scalar_lea.vmem [#allocation4], %s199
      %273 = vst.msk [vmem:[%s272] sm:$0x1] %vm268, %v271
      %s274 = scalar_lea.vmem [#allocation2], %s206
      %v275 = vld [vmem:[%s274] sm:$0x1]
      %s276 = scalar_lea.vmem [#allocation5], %s199
      %277 = vst.msk [vmem:[%s276] sm:$0x1] %vm268, %v275
      %s278 = scalar_lea.vmem [#allocation2], %s208
      %v279 = vld [vmem:[%s278] sm:$0x1]
      %s280 = scalar_lea.vmem [#allocation6], %s199
      %281 = vst.msk [vmem:[%s280] sm:$0x1] %vm268, %v279
      %s282 = sadd.s32 %s199, 1
      %s283 = scalar_lea.vmem [#allocation2], %s210
      %v284 = vld [vmem:[%s283] sm:$0x1]
      %s285 = scalar_lea.vmem [#allocation3], %s282
      %286 = vst.msk [vmem:[%s285] sm:$0x1] %vm268, %v284
      %s287 = scalar_lea.vmem [#allocation2], %s212
      %v288 = vld [vmem:[%s287] sm:$0x1]
      %s289 = scalar_lea.vmem [#allocation4], %s282
      %290 = vst.msk [vmem:[%s289] sm:$0x1] %vm268, %v288
      %s291 = scalar_lea.vmem [#allocation2], %s214
      %v292 = vld [vmem:[%s291] sm:$0x1]
      %s293 = scalar_lea.vmem [#allocation5], %s282
      %294 = vst.msk [vmem:[%s293] sm:$0x1] %vm268, %v292
      %s295 = scalar_lea.vmem [#allocation2], %s216
      %v296 = vld [vmem:[%s295] sm:$0x1]
      %s297 = scalar_lea.vmem [#allocation6], %s282
      %298 = vst.msk [vmem:[%s297] sm:$0x1] %vm268, %v296
      %s299 = sadd.s32 %s199, 2
      %s300 = scalar_lea.vmem [#allocation2], %s218
      %v301 = vld [vmem:[%s300] sm:$0x1]
      %s302 = scalar_lea.vmem [#allocation3], %s299
      %303 = vst.msk [vmem:[%s302] sm:$0x1] %vm268, %v301
      %s304 = scalar_lea.vmem [#allocation2], %s220
      %v305 = vld [vmem:[%s304] sm:$0x1]
      %s306 = scalar_lea.vmem [#allocation4], %s299
      %307 = vst.msk [vmem:[%s306] sm:$0x1] %vm268, %v305
      %s308 = scalar_lea.vmem [#allocation2], %s222
      %v309 = vld [vmem:[%s308] sm:$0x1]
      %s310 = scalar_lea.vmem [#allocation5], %s299
      %311 = vst.msk [vmem:[%s310] sm:$0x1] %vm268, %v309
      %s312 = scalar_lea.vmem [#allocation2], %s224
      %v313 = vld [vmem:[%s312] sm:$0x1]
      %s314 = scalar_lea.vmem [#allocation6], %s299
      %315 = vst.msk [vmem:[%s314] sm:$0x1] %vm268, %v313
      %s316 = sadd.s32 %s199, 3
      %s317 = scalar_lea.vmem [#allocation2], %s226
      %v318 = vld [vmem:[%s317] sm:$0x1]
      %s319 = scalar_lea.vmem [#allocation3], %s316
      %320 = vst.msk [vmem:[%s319] sm:$0x1] %vm268, %v318
      %s321 = scalar_lea.vmem [#allocation2], %s228
      %v322 = vld [vmem:[%s321] sm:$0x1]
      %s323 = scalar_lea.vmem [#allocation4], %s316
      %324 = vst.msk [vmem:[%s323] sm:$0x1] %vm268, %v322
      %s325 = scalar_lea.vmem [#allocation2], %s230
      %v326 = vld [vmem:[%s325] sm:$0x1]
      %s327 = scalar_lea.vmem [#allocation5], %s316
      %328 = vst.msk [vmem:[%s327] sm:$0x1] %vm268, %v326
      %s329 = scalar_lea.vmem [#allocation2], %s232
      %v330 = vld [vmem:[%s329] sm:$0x1]
      %s331 = scalar_lea.vmem [#allocation6], %s316
      %332 = vst.msk [vmem:[%s331] sm:$0x1] %vm268, %v330
      %s333 = sadd.s32 %s199, 4
      %s334 = scalar_lea.vmem [#allocation2], %s234
      %v335 = vld [vmem:[%s334] sm:$0x1]
      %s336 = scalar_lea.vmem [#allocation3], %s333
      %337 = vst.msk [vmem:[%s336] sm:$0x1] %vm268, %v335
      %s338 = scalar_lea.vmem [#allocation2], %s236
      %v339 = vld [vmem:[%s338] sm:$0x1]
      %s340 = scalar_lea.vmem [#allocation4], %s333
      %341 = vst.msk [vmem:[%s340] sm:$0x1] %vm268, %v339
      %s342 = scalar_lea.vmem [#allocation2], %s238
      %v343 = vld [vmem:[%s342] sm:$0x1]
      %s344 = scalar_lea.vmem [#allocation5], %s333
      %345 = vst.msk [vmem:[%s344] sm:$0x1] %vm268, %v343
      %s346 = scalar_lea.vmem [#allocation2], %s240
      %v347 = vld [vmem:[%s346] sm:$0x1]
      %s348 = scalar_lea.vmem [#allocation6], %s333
      %349 = vst.msk [vmem:[%s348] sm:$0x1] %vm268, %v347
      %s350 = sadd.s32 %s199, 5
      %s351 = scalar_lea.vmem [#allocation2], %s242
      %v352 = vld [vmem:[%s351] sm:$0x1]
      %s353 = scalar_lea.vmem [#allocation3], %s350
      %354 = vst.msk [vmem:[%s353] sm:$0x1] %vm268, %v352
      %s355 = scalar_lea.vmem [#allocation2], %s244
      %v356 = vld [vmem:[%s355] sm:$0x1]
      %s357 = scalar_lea.vmem [#allocation4], %s350
      %358 = vst.msk [vmem:[%s357] sm:$0x1] %vm268, %v356
      %s359 = scalar_lea.vmem [#allocation2], %s246
      %v360 = vld [vmem:[%s359] sm:$0x1]
      %s361 = scalar_lea.vmem [#allocation5], %s350
      %362 = vst.msk [vmem:[%s361] sm:$0x1] %vm268, %v360
      %s363 = scalar_lea.vmem [#allocation2], %s248
      %v364 = vld [vmem:[%s363] sm:$0x1]
      %s365 = scalar_lea.vmem [#allocation6], %s350
      %366 = vst.msk [vmem:[%s365] sm:$0x1] %vm268, %v364
      %s367 = sadd.s32 %s199, 6
      %s368 = scalar_lea.vmem [#allocation2], %s250
      %v369 = vld [vmem:[%s368] sm:$0x1]
      %s370 = scalar_lea.vmem [#allocation3], %s367
      %371 = vst.msk [vmem:[%s370] sm:$0x1] %vm268, %v369
      %s372 = scalar_lea.vmem [#allocation2], %s252
      %v373 = vld [vmem:[%s372] sm:$0x1]
      %s374 = scalar_lea.vmem [#allocation4], %s367
      %375 = vst.msk [vmem:[%s374] sm:$0x1] %vm268, %v373
      %s376 = scalar_lea.vmem [#allocation2], %s254
      %v377 = vld [vmem:[%s376] sm:$0x1]
      %s378 = scalar_lea.vmem [#allocation5], %s367
      %379 = vst.msk [vmem:[%s378] sm:$0x1] %vm268, %v377
      %s380 = scalar_lea.vmem [#allocation2], %s256
      %v381 = vld [vmem:[%s380] sm:$0x1]
      %s382 = scalar_lea.vmem [#allocation6], %s367
      %383 = vst.msk [vmem:[%s382] sm:$0x1] %vm268, %v381
      %s384 = sadd.s32 %s199, 7
      %s385 = scalar_lea.vmem [#allocation2], %s258
      %v386 = vld [vmem:[%s385] sm:$0x1]
      %s387 = scalar_lea.vmem [#allocation3], %s384
      %388 = vst.msk [vmem:[%s387] sm:$0x1] %vm268, %v386
      %s389 = scalar_lea.vmem [#allocation2], %s260
      %v390 = vld [vmem:[%s389] sm:$0x1]
      %s391 = scalar_lea.vmem [#allocation4], %s384
      %392 = vst.msk [vmem:[%s391] sm:$0x1] %vm268, %v390
      %s393 = scalar_lea.vmem [#allocation2], %s262
      %v394 = vld [vmem:[%s393] sm:$0x1]
      %s395 = scalar_lea.vmem [#allocation5], %s384
      %396 = vst.msk [vmem:[%s395] sm:$0x1] %vm268, %v394
      %s397 = scalar_lea.vmem [#allocation2], %s264
      %v398 = vld [vmem:[%s397] sm:$0x1]
      %s399 = scalar_lea.vmem [#allocation6], %s384
      %400 = vst.msk [vmem:[%s399] sm:$0x1] %vm268, %v398
    $region48: #{tpu_custom_call.1} parent=1 // loop_footer
      %s198 = sadd.s32 1, %s194
    $region49: #{tpu_custom_call.1} parent=1 // loop_footer_branch
      %193 = sbr.rel target = $region45
    $region50: #{tpu_custom_call.1} parent=1 // loop_exit
      _
    %v401 = vld [vmem:[%s1] sm:$0xff]
    %v402 = vld [vmem:[%s1 + $0x8] sm:$0xff]
    %v403 = vcvt.f32.s32.to.zero.pseudo %v401
    %v404 = vcvt.f32.s32.to.zero.pseudo %v402
    %v405 = vlaneseq
    %v406 = vand.u32 %v405, 127
    %407 = vset.pattern.permute.xlu0 6
    %408 = vperm.xlu0 %407, %v403
    %v409 = vpop.permute.xlu0 %408
    %410 = vset.pattern.permute.xlu0 6
    %411 = vperm.xlu0 %410, %v404
    %v412 = vpop.permute.xlu0 %411
    %vm413 = vcmp.eq.s32.totalorder %v406, %v409
    %vm414 = vcmp.eq.s32.totalorder %v406, %v412
    %416 = vset.pattern.permute.xlu0 4
    %417 = vperm.xlu0 %416, %v401
    %v418 = vpop.permute.xlu0 %417
    %421 = vset.pattern.permute.xlu0 4
    %422 = vperm.xlu0 %421, %v402
    %v423 = vpop.permute.xlu0 %422
    %v425 = vsel %vm413, %v418, 0.0
    %v426 = vsel %vm414, %v423, 0.0
    %427 = vset.pattern.permute.xlu0 7
    %428 = vperm.xlu0 %427, %v403
    %v429 = vpop.permute.xlu0 %428
    %430 = vset.pattern.permute.xlu0 7
    %431 = vperm.xlu0 %430, %v404
    %v432 = vpop.permute.xlu0 %431
    %vm433 = vcmp.eq.s32.totalorder %v406, %v429
    %vm434 = vcmp.eq.s32.totalorder %v406, %v432
    %435 = vset.pattern.permute.xlu0 5
    %436 = vperm.xlu0 %435, %v401
    %v437 = vpop.permute.xlu0 %436
    %439 = vset.pattern.permute.xlu0 5
    %440 = vperm.xlu0 %439, %v402
    %v441 = vpop.permute.xlu0 %440
    %v443 = vsel %vm433, %v437, 0.0
    %v444 = vsel %vm434, %v441, 0.0
    %v445 = vadd.f32 %v425, %v443
    %v446 = vadd.f32 %v426, %v444
    %447 = vrot.lane.b32.xlu0 %v401, 126
    %v448 = vpop.permute.xlu0 %447
    %449 = vrot.lane.b32.xlu0 %v402, 126
    %v450 = vpop.permute.xlu0 %449
    %v453 = vmul.f32 %v401, %v448
    %v454 = vmul.f32 %v402, %v450
    %v455 = vld [vmem:[#allocation3] sm:$0xff]
    %v456 = vld [vmem:[#allocation3 + $0x8] sm:$0xff]
    %458 = vset.pattern.permute.xlu0 0
    %459 = vperm.xlu0 %458, %v453
    %v460 = vpop.permute.xlu0 %459
    %463 = vset.pattern.permute.xlu0 0
    %464 = vperm.xlu0 %463, %v454
    %v465 = vpop.permute.xlu0 %464
    %v467 = vmul.f32 %v460, %v455
    %v468 = vmul.f32 %v465, %v456
    %469 = vrot.lane.b32.xlu0 %v401, 125
    %v470 = vpop.permute.xlu0 %469
    %471 = vrot.lane.b32.xlu0 %v402, 125
    %v472 = vpop.permute.xlu0 %471
    %v475 = vmul.f32 %v401, %v470
    %v476 = vmul.f32 %v402, %v472
    %v477 = vld [vmem:[#allocation4] sm:$0xff]
    %v478 = vld [vmem:[#allocation4 + $0x8] sm:$0xff]
    %480 = vset.pattern.permute.xlu0 0
    %481 = vperm.xlu0 %480, %v475
    %v482 = vpop.permute.xlu0 %481
    %485 = vset.pattern.permute.xlu0 0
    %486 = vperm.xlu0 %485, %v476
    %v487 = vpop.permute.xlu0 %486
    %v489 = vmul.f32 %v482, %v477
    %v490 = vmul.f32 %v487, %v478
    %v491 = vadd.f32 %v467, %v489
    %v492 = vadd.f32 %v468, %v490
    %493 = vrot.lane.b32.xlu0 %v401, 127
    %v494 = vpop.permute.xlu0 %493
    %495 = vrot.lane.b32.xlu0 %v402, 127
    %v496 = vpop.permute.xlu0 %495
    %v499 = vmul.f32 %v401, %v494
    %v500 = vmul.f32 %v402, %v496
    %v501 = vld [vmem:[#allocation5] sm:$0xff]
    %v502 = vld [vmem:[#allocation5 + $0x8] sm:$0xff]
    %504 = vset.pattern.permute.xlu0 1
    %505 = vperm.xlu0 %504, %v499
    %v506 = vpop.permute.xlu0 %505
    %509 = vset.pattern.permute.xlu0 1
    %510 = vperm.xlu0 %509, %v500
    %v511 = vpop.permute.xlu0 %510
    %v513 = vmul.f32 %v506, %v501
    %v514 = vmul.f32 %v511, %v502
    %v515 = vadd.f32 %v491, %v513
    %v516 = vadd.f32 %v492, %v514
    %v517 = vld [vmem:[#allocation6] sm:$0xff]
    %v518 = vld [vmem:[#allocation6 + $0x8] sm:$0xff]
    %519 = vset.pattern.permute.xlu0 1
    %520 = vperm.xlu0 %519, %v453
    %v521 = vpop.permute.xlu0 %520
    %523 = vset.pattern.permute.xlu0 1
    %524 = vperm.xlu0 %523, %v454
    %v525 = vpop.permute.xlu0 %524
    %v527 = vmul.f32 %v521, %v517
    %v528 = vmul.f32 %v525, %v518
    %v529 = vadd.f32 %v515, %v527
    %v530 = vadd.f32 %v516, %v528
    %v531 = vmul.f32 %v529, %v445
    %v532 = vmul.f32 %v530, %v446
    %vm533 = vcmask 130048
    %v534 = vsel %vm533, %v531, 0.0
    %535 = vadd.xlane.f32.xlu0 %v534
    %v536 = vpop.xlane.xlu0 %535
    %v537 = vsel %vm533, %v532, 0.0
    %538 = vadd.xlane.f32.xlu0 %v537
    %v539 = vpop.xlane.xlu0 %538
    %v540 = vand.u32 2147483647, %v536
    %v541 = vand.u32 2147483647, %v539
    %vm542 = vcmp.le.f32.partialorder %v540, 1.0
    %vm543 = vcmp.le.f32.partialorder %v541, 1.0
    %v544 = vmul.f32 %v536, 0.5
    %v545 = vmul.f32 %v539, 0.5
    %v546 = vmul.f32 %v544, %v536
    %v547 = vmul.f32 %v545, %v539
    %v548 = vsub.f32 %v540, 0.5
    %v549 = vsub.f32 %v541, 0.5
    %v550 = vsel %vm542, %v546, %v548
    %v551 = vsel %vm543, %v547, %v549
    %v552 = vlaneseq
    %v553 = vshrl.u32 %v552, 7
    %v554 = vadd.s32 %v553, 8
    %v555 = vstv %s192
    %v556 = vadd.s32 %v553, %v555
    %v557 = vadd.s32 %v554, %v555
    %vm558 = vcmp.lt.s32.totalorder %v556, 16
    %vm559 = vcmp.lt.s32.totalorder %v557, 16
    %v560 = vsel %vm558, 1, 0
    %v561 = vsel %vm559, 1, 0
    %v562 = vcvt.s32.f32 %v560
    %v563 = vcvt.s32.f32 %v561
    %v564 = vmul.f32 %v550, %v562
    %v565 = vmul.f32 %v551, %v563
    %v566 = vadd.f32 %v564, %v565
    %v567 = vrot.slane %v566, 4
    %v568 = vadd.f32 %v566, %v567
    %v569 = vrot.slane %v568, 2
    %v570 = vadd.f32 %v568, %v569
    %v571 = vrot.slane %v570, 1
    %v572 = vadd.f32 %v570, %v571
    %vm573 = vcmask 0
    %574 = vst.msk [vmem:[#allocation10] sm:$0x1] %vm573, %v572
    // Predicated region
    $region51: #{tpu_custom_call.1} parent=1 // pred_check
      _
    $region52: #{tpu_custom_call.1} parent=1 // pred_check_branch
      %576 = sbr.rel (0) target = $region54
    $region53: #{tpu_custom_call.1} parent=1 // pred_region
      %s578 = ssub.s32 16, 16
      %579 = vsyncadd [#allocation11], %s578
      %s581 = sshll.u32 [#allocation10], 4
      %s582 = int_to_ptr.vmem [resolvable:$true] %s581
      %584 = dma.vmem_to_hbm [thread:$0]  %s582, 16, %s3, [#allocation11]
    $region54: #{tpu_custom_call.1} parent=1 // pred_fallthru
      _
    // Predicated region
    $region55: #{tpu_custom_call.1} parent=1 // pred_check
      _
    $region56: #{tpu_custom_call.1} parent=1 // pred_check_branch
      %586 = sbr.rel (0) target = $region58
    $region57: #{tpu_custom_call.1} parent=1 // pred_region
      %587 = dma.done [#allocation11], 16
    $region58: #{tpu_custom_call.1} parent=1 // pred_fallthru
      _
    %588 = vsyncpa [#allocation11], 1
  %589 = vsyncmov [#allocation7]
  %s590 = vpop.sfrf %589
  %p591 = scmp.eq.s32.totalorder %s590, 0
  %p592 = pneg %p591
  %594 = shalt.err (%p592)

</llo_original>
